<compile_context>
chip_gen: v6e
topology: v6e:2x2x1
jax: 0.10.0
libtpu: 0.0.40
codegen_flags: <defaults>
</compile_context>

<pallas_src>
import functools
from typing import NamedTuple

import jax
import jax.numpy as jnp
from jax.experimental import pallas as pl
from jax.experimental.pallas import tpu as pltpu

MAX_ACTION = 1.0   # self.max_action
NUM_TANH_COLS = 2  # layer_3 produces the first 2 (tanh) columns


def _round_up(n, m):
    return ((n + m - 1) // m) * m


# ----------------------------------------------------------------------------
# Kernel
# ----------------------------------------------------------------------------
def actor_kernel(x_ref, w1_ref, b1_ref, w2_ref, b2_ref, w34_ref, b34_ref,
                 a_ref, c_ref, o_ref):
    wdt = w1_ref.dtype  # matmul operand dtype (f32 or bf16); accum is f32.

    # layer_1 + relu (bias/relu in f32)
    h1 = jnp.dot(x_ref[...].astype(wdt), w1_ref[...],
                 preferred_element_type=jnp.float32)
    h1 = jnp.maximum(h1 + b1_ref[...], 0.0)

    # layer_2 + relu
    h2 = jnp.dot(h1.astype(wdt), w2_ref[...],
                 preferred_element_type=jnp.float32)
    h2 = jnp.maximum(h2 + b2_ref[...], 0.0)

    # fused heads: one matmul; tanh columns were pre-scaled by 2 in the
    # wrapper so a single sigmoid covers both activations:
    #   tanh cols:    out = 2*M*sigmoid(2z) - M   (== M * tanh(z))
    #   sigmoid cols: out =   M*sigmoid(z)
    z = jnp.dot(h2.astype(wdt), w34_ref[...],
                preferred_element_type=jnp.float32)
    z = z + b34_ref[...]
    out = a_ref[...] * jax.nn.sigmoid(z) + c_ref[...]
    o_ref[...] = out.astype(o_ref.dtype)


# ----------------------------------------------------------------------------
# One-time parameter preparation (static layout plumbing, hoisted out of the
# per-call path).
# ----------------------------------------------------------------------------
class PreparedActorParams(NamedTuple):
    w1: jax.Array    # (k_pad, 256)  f32 or bf16
    b1: jax.Array    # (1, 256)      f32
    w2: jax.Array    # (256, 128)    f32 or bf16
    b2: jax.Array    # (1, 128)      f32
    w34: jax.Array   # (128, n_pad)  f32 or bf16 (tanh cols pre-scaled by 2)
    b34: jax.Array   # (1, n_pad)    f32         (tanh cols pre-scaled by 2)
    a: jax.Array     # (1, n_pad)    f32  per-column output scale
    c: jax.Array     # (1, n_pad)    f32  per-column output offset


def prepare_params(params, max_action=MAX_ACTION, use_bf16=False):
    """Fuse the two heads, fold the tanh identity, pad to lane-dense shapes."""
    w1, b1, w2, b2, w3, b3, w4, b4 = params
    state_dim = w1.shape[0]
    action_dim = w3.shape[1] + w4.shape[1]
    n_tanh = w3.shape[1]
    n_pad = max(128, _round_up(action_dim, 128))

    # Fold the factor 2 of tanh(z) = 2*sigmoid(2z) - 1 into the tanh head.
    w34 = jnp.concatenate([2.0 * w3, w4], axis=1)
    b34 = jnp.concatenate([2.0 * b3, b4], axis=1)
    w34 = jnp.pad(w34, ((0, 0), (0, n_pad - action_dim)))
    b34 = jnp.pad(b34, ((0, 0), (0, n_pad - action_dim)))

    # Per-column affine applied after the single sigmoid.
    col = jnp.arange(n_pad)[None, :]
    is_tanh = col < n_tanh
    is_valid = col < action_dim
    a = jnp.where(is_tanh, 2.0 * max_action,
                  jnp.where(is_valid, max_action, 0.0)).astype(jnp.float32)
    c = jnp.where(is_tanh, -max_action, 0.0).astype(jnp.float32)

    # Lane-dense contraction dim for layer 1.
    k_pad = _round_up(state_dim, 128)
    w1_p = jnp.pad(w1, ((0, k_pad - state_dim), (0, 0)))

    wdt = jnp.bfloat16 if use_bf16 else jnp.float32
    prep = PreparedActorParams(
        w1=w1_p.astype(wdt), b1=b1.astype(jnp.float32),
        w2=w2.astype(wdt), b2=b2.astype(jnp.float32),
        w34=w34.astype(wdt), b34=b34.astype(jnp.float32),
        a=a, c=c)
    return prep, action_dim


# ----------------------------------------------------------------------------
# Per-call wrapper
# ----------------------------------------------------------------------------
@functools.partial(jax.jit, static_argnames=("action_dim", "batch_tile"))
def actor_forward(x, prep, action_dim, batch_tile=None):
    """x: (batch, state_dim) f32. prep: PreparedActorParams."""
    w1, b1, w2, b2, w34, b34, a, c = prep
    batch, state_dim = x.shape
    k_pad, hid1 = w1.shape           # (128, 256)
    hid2 = w2.shape[1]               # 128
    n_pad = w34.shape[1]             # 128

    # ---- batch tiling -------------------------------------------------------
    m0 = _round_up(batch, 8)
    if batch_tile is None:
        if m0 <= 16:
            tb = m0                                   # trivial batch: 1 step
        else:
            # >= 2 grid steps so the 'parallel' axis shards across both v7x
            # TensorCores; tile capped at 2048 rows (working set ~8 MiB).
            tb = min(2048, _round_up(pl.cdiv(m0, 2), 8))
    else:
        tb = _round_up(int(batch_tile), 8)            # enforce sublane multiple
    m_pad = _round_up(max(batch, tb), tb)
    grid = (m_pad // tb,)

    # Only the activation padding remains in the per-call path.
    x_p = jnp.pad(x, ((0, m_pad - batch), (0, k_pad - state_dim)))

    # ---- advisory cost estimate --------------------------------------------
    flops = 2 * m_pad * (k_pad * hid1 + hid1 * hid2 + hid2 * n_pad)
    bytes_accessed = (
        x_p.size * x_p.dtype.itemsize
        + w1.size * w1.dtype.itemsize + b1.size * 4
        + w2.size * w2.dtype.itemsize + b2.size * 4
        + w34.size * w34.dtype.itemsize + b34.size * 4
        + a.size * 4 + c.size * 4
        + m_pad * n_pad * 4)
    cost = pl.CostEstimate(flops=flops,
                           transcendentals=m_pad * n_pad,   # one sigmoid/elem
                           bytes_accessed=bytes_accessed)

    out = pl.pallas_call(
        actor_kernel,
        out_shape=jax.ShapeDtypeStruct((m_pad, n_pad), jnp.float32),
        grid=grid,
        in_specs=[
            # batch-tiled activation input
            pl.BlockSpec((tb, k_pad), lambda i: (i, 0)),
            # weights / biases / activation constants: same block every step
            # -> DMA'd once, VMEM-resident across grid iterations
            pl.BlockSpec((k_pad, hid1), lambda i: (0, 0)),
            pl.BlockSpec((1, hid1), lambda i: (0, 0)),
            pl.BlockSpec((hid1, hid2), lambda i: (0, 0)),
            pl.BlockSpec((1, hid2), lambda i: (0, 0)),
            pl.BlockSpec((hid2, n_pad), lambda i: (0, 0)),
            pl.BlockSpec((1, n_pad), lambda i: (0, 0)),
            pl.BlockSpec((1, n_pad), lambda i: (0, 0)),
            pl.BlockSpec((1, n_pad), lambda i: (0, 0)),
        ],
        out_specs=pl.BlockSpec((tb, n_pad), lambda i: (i, 0)),
        compiler_params=pltpu.CompilerParams(
            dimension_semantics=("parallel",),
            vmem_limit_bytes=32 * 1024 * 1024),
        cost_estimate=cost,
    )(x_p, w1, b1, w2, b2, w34, b34, a, c)

    # Slice away batch and lane padding (free layout plumbing).
    return out[:batch, :action_dim]


# ----------------------------------------------------------------------------
# Synthetic init + pure-JAX reference
# ----------------------------------------------------------------------------
def init_params(key, state_dim, action_dim):
    # PyTorch-like uniform fan-in init; weights stored pre-transposed (in, out).
    ks = jax.random.split(key, 8)

    def lin(kw, kb, fan_in, fan_out):
        bound = 1.0 / jnp.sqrt(fan_in)
        w = jax.random.uniform(kw, (fan_in, fan_out), jnp.float32, -bound, bound)
        b = jax.random.uniform(kb, (1, fan_out), jnp.float32, -bound, bound)
        return w, b

    w1, b1 = lin(ks[0], ks[1], state_dim, 256)
    w2, b2 = lin(ks[2], ks[3], 256, 128)
    w3, b3 = lin(ks[4], ks[5], 128, 2)
    # NOTE: assumes action_dim >= 2 (w4 may be zero-width when action_dim == 2).
    w4, b4 = lin(ks[6], ks[7], 128, action_dim - 2)
    return (w1, b1, w2, b2, w3, b3, w4, b4)


def actor_reference(x, params):
    w1, b1, w2, b2, w3, b3, w4, b4 = params
    h = jnp.maximum(jnp.dot(x, w1, preferred_element_type=jnp.float32) + b1, 0.0)
    h = jnp.maximum(jnp.dot(h, w2, preferred_element_type=jnp.float32) + b2, 0.0)
    x1 = MAX_ACTION * jnp.tanh(jnp.dot(h, w3, preferred_element_type=jnp.float32) + b3)
    x2 = MAX_ACTION * jax.nn.sigmoid(jnp.dot(h, w4, preferred_element_type=jnp.float32) + b4)
    return jnp.concatenate([x1, x2], axis=1)


if __name__ == "__main__":
    state_dim = 24
    action_dim = 4
    batch = 2

    key = jax.random.PRNGKey(0)
    kx, kp = jax.random.split(key)
    x = jax.random.normal(kx, (batch, state_dim), jnp.float32)
    params = init_params(kp, state_dim, action_dim)

    # --- f32 path (validation-grade accuracy) -------------------------------
    prep_f32, adim = prepare_params(params, MAX_ACTION, use_bf16=False)
    out = jax.block_until_ready(actor_forward(x, prep_f32, action_dim=adim))
    ref = actor_reference(x, params)
    assert out.shape == (batch, action_dim), out.shape
    assert jnp.allclose(out, ref, atol=1e-5, rtol=1e-5), (
        float(jnp.max(jnp.abs(out - ref))))

    # Larger batch: default tiling (>= 2 grid steps -> both v7x TCs used).
    big_batch = 512
    xb = jax.random.normal(jax.random.PRNGKey(1), (big_batch, state_dim),
                           jnp.float32)
    out_b = jax.block_until_ready(actor_forward(xb, prep_f32, action_dim=adim))
    ref_b = actor_reference(xb, params)
    assert out_b.shape == (big_batch, action_dim)
    assert jnp.allclose(out_b, ref_b, atol=1e-5, rtol=1e-5), (
        float(jnp.max(jnp.abs(out_b - ref_b))))

    # Explicit (non-multiple-of-8) user tile exercises the rounding path.
    out_c = jax.block_until_ready(
        actor_forward(xb, prep_f32, action_dim=adim, batch_tile=200))
    assert jnp.allclose(out_c, ref_b, atol=1e-5, rtol=1e-5), (
        float(jnp.max(jnp.abs(out_c - ref_b))))

    # --- bf16 MXU-operand path (looser tolerance vs. the f32 reference) -----
    prep_bf16, _ = prepare_params(params, MAX_ACTION, use_bf16=True)
    out_h = jax.block_until_ready(actor_forward(xb, prep_bf16, action_dim=adim))
    assert out_h.shape == (big_batch, action_dim)
    assert jnp.allclose(out_h, ref_b, atol=1e-1, rtol=0.0), (
        float(jnp.max(jnp.abs(out_h - ref_b))))

    print("KERNEL_OK")
</pallas_src>

<mosaic_0001>
module attributes {stable_mosaic.version = 11 : i64} {
  func.func @actor_kernel(%arg0: i32, %arg1: memref<8x128xf32, #tpu.memory_space<vmem>>, %arg2: memref<128x256xf32, #tpu.memory_space<vmem>>, %arg3: memref<1x256xf32, #tpu.memory_space<vmem>>, %arg4: memref<256x128xf32, #tpu.memory_space<vmem>>, %arg5: memref<1x128xf32, #tpu.memory_space<vmem>>, %arg6: memref<128x128xf32, #tpu.memory_space<vmem>>, %arg7: memref<1x128xf32, #tpu.memory_space<vmem>>, %arg8: memref<1x128xf32, #tpu.memory_space<vmem>>, %arg9: memref<1x128xf32, #tpu.memory_space<vmem>>, %arg10: memref<8x128xf32, #tpu.memory_space<vmem>>) attributes {dimension_semantics = [#tpu.dimension_semantics<parallel>], iteration_bounds = array<i64: 1>, scalar_prefetch = 0 : i64, scratch_operands = 0 : i64, tpu.core_type = #tpu.core_type<tc>, window_params = [{transform_indices = @transform_0, window_bounds = array<i64: 8, 128>}, {pipeline_mode = #tpu.pipeline_mode<synchronous>, transform_indices = @transform_1, window_bounds = array<i64: 128, 256>}, {pipeline_mode = #tpu.pipeline_mode<synchronous>, transform_indices = @transform_2, window_bounds = array<i64: 1, 256>}, {pipeline_mode = #tpu.pipeline_mode<synchronous>, transform_indices = @transform_3, window_bounds = array<i64: 256, 128>}, {pipeline_mode = #tpu.pipeline_mode<synchronous>, transform_indices = @transform_4, window_bounds = array<i64: 1, 128>}, {pipeline_mode = #tpu.pipeline_mode<synchronous>, transform_indices = @transform_5, window_bounds = array<i64: 128, 128>}, {pipeline_mode = #tpu.pipeline_mode<synchronous>, transform_indices = @transform_6, window_bounds = array<i64: 1, 128>}, {pipeline_mode = #tpu.pipeline_mode<synchronous>, transform_indices = @transform_7, window_bounds = array<i64: 1, 128>}, {pipeline_mode = #tpu.pipeline_mode<synchronous>, transform_indices = @transform_8, window_bounds = array<i64: 1, 128>}, {transform_indices = @transform_9, window_bounds = array<i64: 8, 128>}]} {
    %c0 = arith.constant 0 : index
    %c0_0 = arith.constant 0 : index
    %0 = vector.load %arg1[%c0, %c0_0] : memref<8x128xf32, #tpu.memory_space<vmem>>, vector<8x128xf32>
    %c0_1 = arith.constant 0 : index
    %c0_2 = arith.constant 0 : index
    %1 = vector.load %arg2[%c0_1, %c0_2] : memref<128x256xf32, #tpu.memory_space<vmem>>, vector<128x256xf32>
    %cst = arith.constant dense<0.000000e+00> : vector<8x256xf32>
    %2 = tpu.matmul %0, %1, %cst {dimension_numbers = #tpu.dot_dimension_numbers<[1], [0], [0], [1], [0, 0, 1, 1], [], []>} : vector<8x128xf32>, vector<128x256xf32>, vector<8x256xf32> -> vector<8x256xf32>
    %c0_3 = arith.constant 0 : index
    %c0_4 = arith.constant 0 : index
    %3 = vector.load %arg3[%c0_3, %c0_4] : memref<1x256xf32, #tpu.memory_space<vmem>>, vector<1x256xf32>
    %4 = vector.broadcast %3 : vector<1x256xf32> to vector<8x256xf32>
    %5 = arith.addf %2, %4 : vector<8x256xf32>
    %cst_5 = arith.constant 0.000000e+00 : f32
    %6 = vector.broadcast %cst_5 : f32 to vector<8x256xf32>
    %7 = arith.maximumf %5, %6 : vector<8x256xf32>
    %c0_6 = arith.constant 0 : index
    %c0_7 = arith.constant 0 : index
    %8 = vector.load %arg4[%c0_6, %c0_7] : memref<256x128xf32, #tpu.memory_space<vmem>>, vector<256x128xf32>
    %cst_8 = arith.constant dense<0.000000e+00> : vector<8x128xf32>
    %9 = tpu.matmul %7, %8, %cst_8 {dimension_numbers = #tpu.dot_dimension_numbers<[1], [0], [0], [1], [0, 0, 1, 1], [], []>} : vector<8x256xf32>, vector<256x128xf32>, vector<8x128xf32> -> vector<8x128xf32>
    %c0_9 = arith.constant 0 : index
    %c0_10 = arith.constant 0 : index
    %10 = vector.load %arg5[%c0_9, %c0_10] : memref<1x128xf32, #tpu.memory_space<vmem>>, vector<1x128xf32>
    %11 = vector.broadcast %10 : vector<1x128xf32> to vector<8x128xf32>
    %12 = arith.addf %9, %11 : vector<8x128xf32>
    %cst_11 = arith.constant 0.000000e+00 : f32
    %13 = vector.broadcast %cst_11 : f32 to vector<8x128xf32>
    %14 = arith.maximumf %12, %13 : vector<8x128xf32>
    %c0_12 = arith.constant 0 : index
    %c0_13 = arith.constant 0 : index
    %15 = vector.load %arg6[%c0_12, %c0_13] : memref<128x128xf32, #tpu.memory_space<vmem>>, vector<128x128xf32>
    %cst_14 = arith.constant dense<0.000000e+00> : vector<8x128xf32>
    %16 = tpu.matmul %14, %15, %cst_14 {dimension_numbers = #tpu.dot_dimension_numbers<[1], [0], [0], [1], [0, 0, 1, 1], [], []>} : vector<8x128xf32>, vector<128x128xf32>, vector<8x128xf32> -> vector<8x128xf32>
    %c0_15 = arith.constant 0 : index
    %c0_16 = arith.constant 0 : index
    %17 = vector.load %arg7[%c0_15, %c0_16] : memref<1x128xf32, #tpu.memory_space<vmem>>, vector<1x128xf32>
    %18 = vector.broadcast %17 : vector<1x128xf32> to vector<8x128xf32>
    %19 = arith.addf %16, %18 : vector<8x128xf32>
    %c0_17 = arith.constant 0 : index
    %c0_18 = arith.constant 0 : index
    %20 = vector.load %arg8[%c0_17, %c0_18] : memref<1x128xf32, #tpu.memory_space<vmem>>, vector<1x128xf32>
    %21 = arith.negf %19 : vector<8x128xf32>
    %22 = math.exp %21 : vector<8x128xf32>
    %cst_19 = arith.constant 1.000000e+00 : f32
    %23 = vector.broadcast %cst_19 : f32 to vector<8x128xf32>
    %24 = arith.addf %23, %22 : vector<8x128xf32>
    %25 = arith.divf %23, %24 : vector<8x128xf32>
    %26 = vector.broadcast %20 : vector<1x128xf32> to vector<8x128xf32>
    %27 = arith.mulf %26, %25 : vector<8x128xf32>
    %c0_20 = arith.constant 0 : index
    %c0_21 = arith.constant 0 : index
    %28 = vector.load %arg9[%c0_20, %c0_21] : memref<1x128xf32, #tpu.memory_space<vmem>>, vector<1x128xf32>
    %29 = vector.broadcast %28 : vector<1x128xf32> to vector<8x128xf32>
    %30 = arith.addf %27, %29 : vector<8x128xf32>
    %c0_22 = arith.constant 0 : index
    %c0_23 = arith.constant 0 : index
    %31 = vector.load %arg10[%c0_22, %c0_23] : memref<8x128xf32, #tpu.memory_space<vmem>>, vector<8x128xf32>
    tpu.vector_store %arg10[%c0_22, %c0_23], %30 {strides = array<i32>} : memref<8x128xf32, #tpu.memory_space<vmem>>, vector<8x128xf32>,
    return
  }
  func.func @transform_0(%arg0: i32) -> (i32, i32) {
    %c0_i32 = arith.constant 0 : i32
    %c0_i32_0 = arith.constant 0 : i32
    return %arg0, %c0_i32 : i32, i32
  }
  func.func @transform_1(%arg0: i32) -> (i32, i32) {
    %c0_i32 = arith.constant 0 : i32
    %c0_i32_0 = arith.constant 0 : i32
    %c0_i32_1 = arith.constant 0 : i32
    return %c0_i32, %c0_i32_0 : i32, i32
  }
  func.func @transform_2(%arg0: i32) -> (i32, i32) {
    %c0_i32 = arith.constant 0 : i32
    %c0_i32_0 = arith.constant 0 : i32
    %c0_i32_1 = arith.constant 0 : i32
    return %c0_i32, %c0_i32_0 : i32, i32
  }
  func.func @transform_3(%arg0: i32) -> (i32, i32) {
    %c0_i32 = arith.constant 0 : i32
    %c0_i32_0 = arith.constant 0 : i32
    %c0_i32_1 = arith.constant 0 : i32
    return %c0_i32, %c0_i32_0 : i32, i32
  }
  func.func @transform_4(%arg0: i32) -> (i32, i32) {
    %c0_i32 = arith.constant 0 : i32
    %c0_i32_0 = arith.constant 0 : i32
    %c0_i32_1 = arith.constant 0 : i32
    return %c0_i32, %c0_i32_0 : i32, i32
  }
  func.func @transform_5(%arg0: i32) -> (i32, i32) {
    %c0_i32 = arith.constant 0 : i32
    %c0_i32_0 = arith.constant 0 : i32
    %c0_i32_1 = arith.constant 0 : i32
    return %c0_i32, %c0_i32_0 : i32, i32
  }
  func.func @transform_6(%arg0: i32) -> (i32, i32) {
    %c0_i32 = arith.constant 0 : i32
    %c0_i32_0 = arith.constant 0 : i32
    %c0_i32_1 = arith.constant 0 : i32
    return %c0_i32, %c0_i32_0 : i32, i32
  }
  func.func @transform_7(%arg0: i32) -> (i32, i32) {
    %c0_i32 = arith.constant 0 : i32
    %c0_i32_0 = arith.constant 0 : i32
    %c0_i32_1 = arith.constant 0 : i32
    return %c0_i32, %c0_i32_0 : i32, i32
  }
  func.func @transform_8(%arg0: i32) -> (i32, i32) {
    %c0_i32 = arith.constant 0 : i32
    %c0_i32_0 = arith.constant 0 : i32
    %c0_i32_1 = arith.constant 0 : i32
    return %c0_i32, %c0_i32_0 : i32, i32
  }
  func.func @transform_9(%arg0: i32) -> (i32, i32) {
    %c0_i32 = arith.constant 0 : i32
    %c0_i32_0 = arith.constant 0 : i32
    return %arg0, %c0_i32 : i32, i32
  }
}

</mosaic_0001>

<llo_original>
// kernel: actor_forward.1
$region0: #{actor_forward.1}
  #allocation0 [shape = 'u32[]', space=smem, size = 0x4, offset = 0x4, fixed_abs, tag = 'smem constant byte address 0x4 - core index']
  #allocation1 [shape = 'u32[144,128]{1,0:T(1,128)}', space=vmem, size = 0x12000, scoped, tag = 'internal scratch']
  %s0 = inlined_call_operand.vmem [shape: f32[8,128], index: 0, kind: input, shape index: {}]
  %s1 = inlined_call_operand.hbm [shape: f32[128,256], index: 1, kind: input, shape index: {}]
  %s2 = inlined_call_operand.vmem [shape: f32[1,256], index: 2, kind: input, shape index: {}]
  %s3 = inlined_call_operand.hbm [shape: f32[256,128], index: 3, kind: input, shape index: {}]
  %s4 = inlined_call_operand.vmem [shape: f32[1,128], index: 4, kind: input, shape index: {}]
  %s5 = inlined_call_operand.hbm [shape: f32[128,128], index: 5, kind: input, shape index: {}]
  %s6 = inlined_call_operand.vmem [shape: f32[1,128], index: 6, kind: input, shape index: {}]
  %s7 = inlined_call_operand.vmem [shape: f32[1,128], index: 7, kind: input, shape index: {}]
  %s8 = inlined_call_operand.vmem [shape: f32[1,128], index: 8, kind: input, shape index: {}]
  %s9 = inlined_call_operand.vmem [shape: f32[8,128], index: 9, kind: output, shape index: {}]
  %s10 = sld [smem:[#allocation0]]
  $region58: #{actor_forward.1} parent=0
    _
  %s12 = ssub.s32 1, %s10
  %s13 = scalar_select 0, %s12, %s10
  $region1: #{actor_forward.1} parent=0
    #allocation2 [shape = 'u8[131072]{0}', space=vmem, size = 0x20000, scoped, tag = 'input window, operand 1, single buffered']
    #allocation3 [shape = 's32[1]{0}', space=sflag, size = 0x4, scoped, tag = 'scoped memory for actor_forward.1']
    #allocation4 [shape = 'u8[131072]{0}', space=vmem, size = 0x20000, scoped, tag = 'input window, operand 3, single buffered']
    #allocation5 [shape = 's32[1]{0}', space=sflag, size = 0x4, scoped, tag = 'scoped memory for actor_forward.1']
    #allocation6 [shape = 'u8[65536]{0}', space=vmem, size = 0x10000, scoped, tag = 'input window, operand 5, single buffered']
    %14 = vsyncpa [#allocation3], 0
    %15 = vsyncpa [#allocation5], 0
    // Predicated region
    $region2: #{actor_forward.1} parent=1 // pred_check
      _
    $region3: #{actor_forward.1} parent=1 // pred_check_branch
      %17 = sbr.rel (0) target = $region5
    $region4: #{actor_forward.1} parent=1 // pred_region
      _
    $region5: #{actor_forward.1} parent=1 // pred_fallthru
      _
    // Predicated region
    $region6: #{actor_forward.1} parent=1 // pred_check
      _
    $region7: #{actor_forward.1} parent=1 // pred_check_branch
      %19 = sbr.rel (0) target = $region9
    $region8: #{actor_forward.1} parent=1 // pred_region
      %s21 = ssub.s32 4096, 4096
      %22 = vsyncadd [#allocation3], %s21
      %s23 = sshll.u32 [#allocation2], 4
      %s24 = int_to_ptr.vmem [resolvable:$true] %s23
      %29 = dma.hbm_to_vmem [thread:$0]  %s1, 4096, %s24, [#allocation3], 256, 256, 16
    $region9: #{actor_forward.1} parent=1 // pred_fallthru
      _
    // Predicated region
    $region10: #{actor_forward.1} parent=1 // pred_check
      _
    $region11: #{actor_forward.1} parent=1 // pred_check_branch
      %31 = sbr.rel (0) target = $region13
    $region12: #{actor_forward.1} parent=1 // pred_region
      _
    $region13: #{actor_forward.1} parent=1 // pred_fallthru
      _
    // Predicated region
    $region14: #{actor_forward.1} parent=1 // pred_check
      _
    $region15: #{actor_forward.1} parent=1 // pred_check_branch
      %33 = sbr.rel (0) target = $region17
    $region16: #{actor_forward.1} parent=1 // pred_region
      %s35 = ssub.s32 4096, 4096
      %36 = vsyncadd [#allocation5], %s35
      %s37 = sshll.u32 [#allocation4], 4
      %s38 = int_to_ptr.vmem [resolvable:$true] %s37
      %43 = dma.hbm_to_vmem [thread:$0]  %s3, 4096, %s38, [#allocation5], 128, 128, 8
    $region17: #{actor_forward.1} parent=1 // pred_fallthru
      _
    // Predicated region
    $region18: #{actor_forward.1} parent=1 // pred_check
      _
    $region19: #{actor_forward.1} parent=1 // pred_check_branch
      %45 = sbr.rel (0) target = $region21
    $region20: #{actor_forward.1} parent=1 // pred_region
      _
    $region21: #{actor_forward.1} parent=1 // pred_fallthru
      _
    // Predicated region
    $region22: #{actor_forward.1} parent=1 // pred_check
      _
    $region23: #{actor_forward.1} parent=1 // pred_check_branch
      %47 = sbr.rel (0) target = $region25
    $region24: #{actor_forward.1} parent=1 // pred_region
      %s49 = ssub.s32 2048, 2048
      %50 = vsyncadd [#allocation5], %s49
      %s51 = sshll.u32 [#allocation6], 4
      %s52 = int_to_ptr.vmem [resolvable:$true] %s51
      %57 = dma.hbm_to_vmem [thread:$0]  %s5, 2048, %s52, [#allocation5], 128, 128, 8
    $region25: #{actor_forward.1} parent=1 // pred_fallthru
      _
    // Predicated region
    $region26: #{actor_forward.1} parent=1 // pred_check
      _
    $region27: #{actor_forward.1} parent=1 // pred_check_branch
      %59 = sbr.rel (0) target = $region29
    $region28: #{actor_forward.1} parent=1 // pred_region
      _
    $region29: #{actor_forward.1} parent=1 // pred_fallthru
      _
    // Predicated region
    $region30: #{actor_forward.1} parent=1 // pred_check
      _
    $region31: #{actor_forward.1} parent=1 // pred_check_branch
      %61 = sbr.rel (0) target = $region33
    $region32: #{actor_forward.1} parent=1 // pred_region
      _
    $region33: #{actor_forward.1} parent=1 // pred_fallthru
      _
    // Predicated region
    $region34: #{actor_forward.1} parent=1 // pred_check
      _
    $region35: #{actor_forward.1} parent=1 // pred_check_branch
      %63 = sbr.rel (0) target = $region37
    $region36: #{actor_forward.1} parent=1 // pred_region
      _
    $region37: #{actor_forward.1} parent=1 // pred_fallthru
      _
    // Predicated region
    $region38: #{actor_forward.1} parent=1 // pred_check
      _
    $region39: #{actor_forward.1} parent=1 // pred_check_branch
      %65 = sbr.rel (0) target = $region41
    $region40: #{actor_forward.1} parent=1 // pred_region
      %66 = dma.done [#allocation3], 4096
    $region41: #{actor_forward.1} parent=1 // pred_fallthru
      _
    // Predicated region
    $region42: #{actor_forward.1} parent=1 // pred_check
      _
    $region43: #{actor_forward.1} parent=1 // pred_check_branch
      %68 = sbr.rel (0) target = $region45
    $region44: #{actor_forward.1} parent=1 // pred_region
      %69 = dma.done [#allocation5], 4096
    $region45: #{actor_forward.1} parent=1 // pred_fallthru
      _
    // Predicated region
    $region46: #{actor_forward.1} parent=1 // pred_check
      _
    $region47: #{actor_forward.1} parent=1 // pred_check_branch
      %71 = sbr.rel (0) target = $region49
    $region48: #{actor_forward.1} parent=1 // pred_region
      %72 = dma.done [#allocation5], 2048
    $region49: #{actor_forward.1} parent=1 // pred_fallthru
      _
    %v73 = vld [vmem:[%s0] sm:$0xff]
    %v74 = vld [vmem:[#allocation2] sm:$0xff]
    %v75 = vld [vmem:[#allocation2 + $0x8] sm:$0xff]
    %v76 = vld [vmem:[#allocation2 + $0x10] sm:$0xff]
    %v77 = vld [vmem:[#allocation2 + $0x18] sm:$0xff]
    %v78 = vld [vmem:[#allocation2 + $0x20] sm:$0xff]
    %v79 = vld [vmem:[#allocation2 + $0x28] sm:$0xff]
    %v80 = vld [vmem:[#allocation2 + $0x30] sm:$0xff]
    %v81 = vld [vmem:[#allocation2 + $0x38] sm:$0xff]
    %v82 = vld [vmem:[#allocation2 + $0x40] sm:$0xff]
    %v83 = vld [vmem:[#allocation2 + $0x48] sm:$0xff]
    %v84 = vld [vmem:[#allocation2 + $0x50] sm:$0xff]
    %v85 = vld [vmem:[#allocation2 + $0x58] sm:$0xff]
    %v86 = vld [vmem:[#allocation2 + $0x60] sm:$0xff]
    %v87 = vld [vmem:[#allocation2 + $0x68] sm:$0xff]
    %v88 = vld [vmem:[#allocation2 + $0x70] sm:$0xff]
    %v89 = vld [vmem:[#allocation2 + $0x78] sm:$0xff]
    %v90 = vld [vmem:[#allocation2 + $0x80] sm:$0xff]
    %v91 = vld [vmem:[#allocation2 + $0x88] sm:$0xff]
    %v92 = vld [vmem:[#allocation2 + $0x90] sm:$0xff]
    %v93 = vld [vmem:[#allocation2 + $0x98] sm:$0xff]
    %v94 = vld [vmem:[#allocation2 + $0xa0] sm:$0xff]
    %v95 = vld [vmem:[#allocation2 + $0xa8] sm:$0xff]
    %v96 = vld [vmem:[#allocation2 + $0xb0] sm:$0xff]
    %v97 = vld [vmem:[#allocation2 + $0xb8] sm:$0xff]
    %v98 = vld [vmem:[#allocation2 + $0xc0] sm:$0xff]
    %v99 = vld [vmem:[#allocation2 + $0xc8] sm:$0xff]
    %v100 = vld [vmem:[#allocation2 + $0xd0] sm:$0xff]
    %v101 = vld [vmem:[#allocation2 + $0xd8] sm:$0xff]
    %v102 = vld [vmem:[#allocation2 + $0xe0] sm:$0xff]
    %v103 = vld [vmem:[#allocation2 + $0xe8] sm:$0xff]
    %v104 = vld [vmem:[#allocation2 + $0xf0] sm:$0xff]
    %v105 = vld [vmem:[#allocation2 + $0xf8] sm:$0xff]
    %v106 = vld [vmem:[%s2] sm:$0x3]
    %v108 = vlaneseq
    %v109 = vshrl.u32 %v108, 7
    %v110 = vsub.s32 0, %v109
    %v111 = vrot.slane %v106, %v110
    %v112 = vlaneseq
    %v113 = vshrl.u32 %v112, 7
    %v114 = vsub.s32 1, %v113
    %v115 = vrot.slane %v106, %v114
    %118 = vmatprep.subr.mxu0 %v105
    %119 = vmatpush1.msra.mxu0 %v104
    %120 = vmatprep.subr.mxu0 %v103
    %121 = vmatpush1.msra.mxu0 %v102
    %122 = vmatprep.subr.mxu0 %v101
    %123 = vmatpush1.msra.mxu0 %v100
    %124 = vmatprep.subr.mxu0 %v99
    %125 = vmatpush1.msra.mxu0 %v98
    %126 = vmatprep.subr.mxu0 %v97
    %127 = vmatpush1.msra.mxu0 %v96
    %128 = vmatprep.subr.mxu0 %v95
    %129 = vmatpush1.msra.mxu0 %v94
    %130 = vmatprep.subr.mxu0 %v93
    %131 = vmatpush1.msra.mxu0 %v92
    %132 = vmatprep.subr.mxu0 %v91
    %133 = vmatpush1.msra.mxu0 %v90
    %134 = vmatprep.subr.mxu0 %v89
    %135 = vmatpush1.msra.mxu0 %v88
    %136 = vmatprep.subr.mxu0 %v87
    %137 = vmatpush1.msra.mxu0 %v86
    %138 = vmatprep.subr.mxu0 %v85
    %139 = vmatpush1.msra.mxu0 %v84
    %140 = vmatprep.subr.mxu0 %v83
    %141 = vmatpush1.msra.mxu0 %v82
    %142 = vmatprep.subr.mxu0 %v81
    %143 = vmatpush1.msra.mxu0 %v80
    %144 = vmatprep.subr.mxu0 %v79
    %145 = vmatpush1.msra.mxu0 %v78
    %146 = vmatprep.subr.mxu0 %v77
    %147 = vmatpush1.msra.mxu0 %v76
    %148 = vmatprep.subr.mxu0 %v75
    %149 = vmatpush1.msra.mxu0 %v74
    %150 = vmatprep.subr.mxu0 0.0
    %151 = vmatpush2.msra.mxu0 0.0
    %152 = vmatprep.subr.mxu0 0.0
    %153 = vmatpush2.msra.mxu0 0.0
    %154 = vmatprep.subr.mxu0 0.0
    %155 = vmatpush2.msra.mxu0 0.0
    %156 = vmatprep.subr.mxu0 0.0
    %157 = vmatpush2.msra.mxu0 0.0
    %158 = vmatprep.subr.mxu0 0.0
    %159 = vmatpush2.msra.mxu0 0.0
    %160 = vmatprep.subr.mxu0 0.0
    %161 = vmatpush2.msra.mxu0 0.0
    %162 = vmatprep.subr.mxu0 0.0
    %163 = vmatpush2.msra.mxu0 0.0
    %164 = vmatprep.subr.mxu0 0.0
    %165 = vmatpush2.msra.mxu0 0.0
    %166 = vmatprep.subr.mxu0 0.0
    %167 = vmatpush2.msra.mxu0 0.0
    %168 = vmatprep.subr.mxu0 0.0
    %169 = vmatpush2.msra.mxu0 0.0
    %170 = vmatprep.subr.mxu0 0.0
    %171 = vmatpush2.msra.mxu0 0.0
    %172 = vmatprep.subr.mxu0 0.0
    %173 = vmatpush2.msra.mxu0 0.0
    %174 = vmatprep.subr.mxu0 0.0
    %175 = vmatpush2.msra.mxu0 0.0
    %176 = vmatprep.subr.mxu0 0.0
    %177 = vmatpush2.msra.mxu0 0.0
    %178 = vmatprep.subr.mxu0 0.0
    %179 = vmatpush2.msra.mxu0 0.0
    %180 = vmatprep.subr.mxu0 0.0
    %181 = vmatpush2.msra.mxu0 0.0
    %182 = vmatprep.mubr.f32.mxu0 0.0
    %183 = vmatmul.mubr.f32.gmra.mxu0 %v73
    %v184 = vpop.f32.mrf.mxu0
    %v185 = vadd.f32 %v111, %v184
    %v186 = vpop.f32.mrf.mxu0
    %v187 = vadd.f32 %v115, %v186
    %188 = vdwg.mxu0
    %v189 = vmax.f32 %v185, 0.0
    %v190 = vmax.f32 %v187, 0.0
    %v191 = vld [vmem:[#allocation4] sm:$0xff]
    %v192 = vld [vmem:[#allocation4 + $0x8] sm:$0xff]
    %v193 = vld [vmem:[#allocation4 + $0x10] sm:$0xff]
    %v194 = vld [vmem:[#allocation4 + $0x18] sm:$0xff]
    %v195 = vld [vmem:[#allocation4 + $0x20] sm:$0xff]
    %v196 = vld [vmem:[#allocation4 + $0x28] sm:$0xff]
    %v197 = vld [vmem:[#allocation4 + $0x30] sm:$0xff]
    %v198 = vld [vmem:[#allocation4 + $0x38] sm:$0xff]
    %v199 = vld [vmem:[#allocation4 + $0x40] sm:$0xff]
    %v200 = vld [vmem:[#allocation4 + $0x48] sm:$0xff]
    %v201 = vld [vmem:[#allocation4 + $0x50] sm:$0xff]
    %v202 = vld [vmem:[#allocation4 + $0x58] sm:$0xff]
    %v203 = vld [vmem:[#allocation4 + $0x60] sm:$0xff]
    %v204 = vld [vmem:[#allocation4 + $0x68] sm:$0xff]
    %v205 = vld [vmem:[#allocation4 + $0x70] sm:$0xff]
    %v206 = vld [vmem:[#allocation4 + $0x78] sm:$0xff]
    %v207 = vld [vmem:[#allocation4 + $0x80] sm:$0xff]
    %v208 = vld [vmem:[#allocation4 + $0x88] sm:$0xff]
    %v209 = vld [vmem:[#allocation4 + $0x90] sm:$0xff]
    %v210 = vld [vmem:[#allocation4 + $0x98] sm:$0xff]
    %v211 = vld [vmem:[#allocation4 + $0xa0] sm:$0xff]
    %v212 = vld [vmem:[#allocation4 + $0xa8] sm:$0xff]
    %v213 = vld [vmem:[#allocation4 + $0xb0] sm:$0xff]
    %v214 = vld [vmem:[#allocation4 + $0xb8] sm:$0xff]
    %v215 = vld [vmem:[#allocation4 + $0xc0] sm:$0xff]
    %v216 = vld [vmem:[#allocation4 + $0xc8] sm:$0xff]
    %v217 = vld [vmem:[#allocation4 + $0xd0] sm:$0xff]
    %v218 = vld [vmem:[#allocation4 + $0xd8] sm:$0xff]
    %v219 = vld [vmem:[#allocation4 + $0xe0] sm:$0xff]
    %v220 = vld [vmem:[#allocation4 + $0xe8] sm:$0xff]
    %v221 = vld [vmem:[#allocation4 + $0xf0] sm:$0xff]
    %v222 = vld [vmem:[#allocation4 + $0xf8] sm:$0xff]
    %v223 = vld [vmem:[%s4] sm:$0x1]
    %v225 = vlaneseq
    %v226 = vshrl.u32 %v225, 7
    %v227 = vsub.s32 0, %v226
    %v228 = vrot.slane %v223, %v227
    %230 = vmatprep.subr.mxu0 0.0
    %231 = vmatpush1.msra.mxu0 %v206
    %232 = vmatprep.subr.mxu0 0.0
    %233 = vmatpush1.msra.mxu0 %v205
    %234 = vmatprep.subr.mxu0 0.0
    %235 = vmatpush1.msra.mxu0 %v204
    %236 = vmatprep.subr.mxu0 0.0
    %237 = vmatpush1.msra.mxu0 %v203
    %238 = vmatprep.subr.mxu0 0.0
    %239 = vmatpush1.msra.mxu0 %v202
    %240 = vmatprep.subr.mxu0 0.0
    %241 = vmatpush1.msra.mxu0 %v201
    %242 = vmatprep.subr.mxu0 0.0
    %243 = vmatpush1.msra.mxu0 %v200
    %244 = vmatprep.subr.mxu0 0.0
    %245 = vmatpush1.msra.mxu0 %v199
    %246 = vmatprep.subr.mxu0 0.0
    %247 = vmatpush1.msra.mxu0 %v198
    %248 = vmatprep.subr.mxu0 0.0
    %249 = vmatpush1.msra.mxu0 %v197
    %250 = vmatprep.subr.mxu0 0.0
    %251 = vmatpush1.msra.mxu0 %v196
    %252 = vmatprep.subr.mxu0 0.0
    %253 = vmatpush1.msra.mxu0 %v195
    %254 = vmatprep.subr.mxu0 0.0
    %255 = vmatpush1.msra.mxu0 %v194
    %256 = vmatprep.subr.mxu0 0.0
    %257 = vmatpush1.msra.mxu0 %v193
    %258 = vmatprep.subr.mxu0 0.0
    %259 = vmatpush1.msra.mxu0 %v192
    %260 = vmatprep.subr.mxu0 0.0
    %261 = vmatpush1.msra.mxu0 %v191
    %262 = vmatprep.subr.mxu0 0.0
    %263 = vmatpush2.msra.mxu0 %v222
    %264 = vmatprep.subr.mxu0 0.0
    %265 = vmatpush2.msra.mxu0 %v221
    %266 = vmatprep.subr.mxu0 0.0
    %267 = vmatpush2.msra.mxu0 %v220
    %268 = vmatprep.subr.mxu0 0.0
    %269 = vmatpush2.msra.mxu0 %v219
    %270 = vmatprep.subr.mxu0 0.0
    %271 = vmatpush2.msra.mxu0 %v218
    %272 = vmatprep.subr.mxu0 0.0
    %273 = vmatpush2.msra.mxu0 %v217
    %274 = vmatprep.subr.mxu0 0.0
    %275 = vmatpush2.msra.mxu0 %v216
    %276 = vmatprep.subr.mxu0 0.0
    %277 = vmatpush2.msra.mxu0 %v215
    %278 = vmatprep.subr.mxu0 0.0
    %279 = vmatpush2.msra.mxu0 %v214
    %280 = vmatprep.subr.mxu0 0.0
    %281 = vmatpush2.msra.mxu0 %v213
    %282 = vmatprep.subr.mxu0 0.0
    %283 = vmatpush2.msra.mxu0 %v212
    %284 = vmatprep.subr.mxu0 0.0
    %285 = vmatpush2.msra.mxu0 %v211
    %286 = vmatprep.subr.mxu0 0.0
    %287 = vmatpush2.msra.mxu0 %v210
    %288 = vmatprep.subr.mxu0 0.0
    %289 = vmatpush2.msra.mxu0 %v209
    %290 = vmatprep.subr.mxu0 0.0
    %291 = vmatpush2.msra.mxu0 %v208
    %292 = vmatprep.subr.mxu0 0.0
    %293 = vmatpush2.msra.mxu0 %v207
    %294 = vmatprep.mubr.f32.mxu0 %v190
    %295 = vmatmul.mubr.f32.gmra.mxu0 %v189
    %v296 = vpop.f32.mrf.mxu0
    %v297 = vadd.f32 %v228, %v296
    %v298 = vpop.f32.mrf.mxu0
    %299 = vdwg.mxu0
    %v300 = vmax.f32 %v297, 0.0
    %v301 = vld [vmem:[#allocation6] sm:$0xff]
    %v302 = vld [vmem:[#allocation6 + $0x8] sm:$0xff]
    %v303 = vld [vmem:[#allocation6 + $0x10] sm:$0xff]
    %v304 = vld [vmem:[#allocation6 + $0x18] sm:$0xff]
    %v305 = vld [vmem:[#allocation6 + $0x20] sm:$0xff]
    %v306 = vld [vmem:[#allocation6 + $0x28] sm:$0xff]
    %v307 = vld [vmem:[#allocation6 + $0x30] sm:$0xff]
    %v308 = vld [vmem:[#allocation6 + $0x38] sm:$0xff]
    %v309 = vld [vmem:[#allocation6 + $0x40] sm:$0xff]
    %v310 = vld [vmem:[#allocation6 + $0x48] sm:$0xff]
    %v311 = vld [vmem:[#allocation6 + $0x50] sm:$0xff]
    %v312 = vld [vmem:[#allocation6 + $0x58] sm:$0xff]
    %v313 = vld [vmem:[#allocation6 + $0x60] sm:$0xff]
    %v314 = vld [vmem:[#allocation6 + $0x68] sm:$0xff]
    %v315 = vld [vmem:[#allocation6 + $0x70] sm:$0xff]
    %v316 = vld [vmem:[#allocation6 + $0x78] sm:$0xff]
    %v317 = vld [vmem:[%s6] sm:$0x1]
    %v319 = vlaneseq
    %v320 = vshrl.u32 %v319, 7
    %v321 = vsub.s32 0, %v320
    %v322 = vrot.slane %v317, %v321
    %324 = vmatprep.subr.mxu0 0.0
    %325 = vmatpush1.msra.mxu0 %v316
    %326 = vmatprep.subr.mxu0 0.0
    %327 = vmatpush1.msra.mxu0 %v315
    %328 = vmatprep.subr.mxu0 0.0
    %329 = vmatpush1.msra.mxu0 %v314
    %330 = vmatprep.subr.mxu0 0.0
    %331 = vmatpush1.msra.mxu0 %v313
    %332 = vmatprep.subr.mxu0 0.0
    %333 = vmatpush1.msra.mxu0 %v312
    %334 = vmatprep.subr.mxu0 0.0
    %335 = vmatpush1.msra.mxu0 %v311
    %336 = vmatprep.subr.mxu0 0.0
    %337 = vmatpush1.msra.mxu0 %v310
    %338 = vmatprep.subr.mxu0 0.0
    %339 = vmatpush1.msra.mxu0 %v309
    %340 = vmatprep.subr.mxu0 0.0
    %341 = vmatpush1.msra.mxu0 %v308
    %342 = vmatprep.subr.mxu0 0.0
    %343 = vmatpush1.msra.mxu0 %v307
    %344 = vmatprep.subr.mxu0 0.0
    %345 = vmatpush1.msra.mxu0 %v306
    %346 = vmatprep.subr.mxu0 0.0
    %347 = vmatpush1.msra.mxu0 %v305
    %348 = vmatprep.subr.mxu0 0.0
    %349 = vmatpush1.msra.mxu0 %v304
    %350 = vmatprep.subr.mxu0 0.0
    %351 = vmatpush1.msra.mxu0 %v303
    %352 = vmatprep.subr.mxu0 0.0
    %353 = vmatpush1.msra.mxu0 %v302
    %354 = vmatprep.subr.mxu0 0.0
    %355 = vmatpush1.msra.mxu0 %v301
    %356 = vmatprep.subr.mxu0 0.0
    %357 = vmatpush2.msra.mxu0 0.0
    %358 = vmatprep.subr.mxu0 0.0
    %359 = vmatpush2.msra.mxu0 0.0
    %360 = vmatprep.subr.mxu0 0.0
    %361 = vmatpush2.msra.mxu0 0.0
    %362 = vmatprep.subr.mxu0 0.0
    %363 = vmatpush2.msra.mxu0 0.0
    %364 = vmatprep.subr.mxu0 0.0
    %365 = vmatpush2.msra.mxu0 0.0
    %366 = vmatprep.subr.mxu0 0.0
    %367 = vmatpush2.msra.mxu0 0.0
    %368 = vmatprep.subr.mxu0 0.0
    %369 = vmatpush2.msra.mxu0 0.0
    %370 = vmatprep.subr.mxu0 0.0
    %371 = vmatpush2.msra.mxu0 0.0
    %372 = vmatprep.subr.mxu0 0.0
    %373 = vmatpush2.msra.mxu0 0.0
    %374 = vmatprep.subr.mxu0 0.0
    %375 = vmatpush2.msra.mxu0 0.0
    %376 = vmatprep.subr.mxu0 0.0
    %377 = vmatpush2.msra.mxu0 0.0
    %378 = vmatprep.subr.mxu0 0.0
    %379 = vmatpush2.msra.mxu0 0.0
    %380 = vmatprep.subr.mxu0 0.0
    %381 = vmatpush2.msra.mxu0 0.0
    %382 = vmatprep.subr.mxu0 0.0
    %383 = vmatpush2.msra.mxu0 0.0
    %384 = vmatprep.subr.mxu0 0.0
    %385 = vmatpush2.msra.mxu0 0.0
    %386 = vmatprep.subr.mxu0 0.0
    %387 = vmatpush2.msra.mxu0 0.0
    %388 = vmatprep.mubr.f32.mxu0 0.0
    %389 = vmatmul.mubr.f32.gmra.mxu0 %v300
    %v390 = vpop.f32.mrf.mxu0
    %v391 = vadd.f32 %v322, %v390
    %v392 = vpop.f32.mrf.mxu0
    %393 = vdwg.mxu0
    %v394 = vld [vmem:[%s7] sm:$0x1]
    %v395 = vxor.u32 %v391, 2147483648
    %v396 = vmul.f32 %v395, 1.442695
    %v397 = vpow.pop %v396
    %v398 = vadd.f32 %v397, 1.0
    %v399 = vrcp.pop %v398
    %v400 = vmul.f32 1.0, %v399
    %v402 = vlaneseq
    %v403 = vshrl.u32 %v402, 7
    %v404 = vsub.s32 0, %v403
    %v405 = vrot.slane %v394, %v404
    %v407 = vmul.f32 %v405, %v400
    %v408 = vld [vmem:[%s8] sm:$0x1]
    %v410 = vlaneseq
    %v411 = vshrl.u32 %v410, 7
    %v412 = vsub.s32 0, %v411
    %v413 = vrot.slane %v408, %v412
    %v415 = vadd.f32 %v407, %v413
    %416 = vst [vmem:[%s9] sm:$0xff] %v415
    // Predicated region
    $region50: #{actor_forward.1} parent=1 // pred_check
      _
    $region51: #{actor_forward.1} parent=1 // pred_check_branch
      %418 = sbr.rel (0) target = $region53
    $region52: #{actor_forward.1} parent=1 // pred_region
      _
    $region53: #{actor_forward.1} parent=1 // pred_fallthru
      _
    // Predicated region
    $region54: #{actor_forward.1} parent=1 // pred_check
      _
    $region55: #{actor_forward.1} parent=1 // pred_check_branch
      %420 = sbr.rel (0) target = $region57
    $region56: #{actor_forward.1} parent=1 // pred_region
      _
    $region57: #{actor_forward.1} parent=1 // pred_fallthru
      _
    %421 = vsyncpa [#allocation3], 1
    %422 = vsyncpa [#allocation5], 1

</llo_original>
